<compile_context>
chip_gen: v5e
topology: v5e:2x2
jax: 0.10.0
libtpu: 0.0.40
codegen_flags: <defaults>
</compile_context>

<pallas_src>
import functools

import jax
import jax.numpy as jnp
from jax.experimental import pallas as pl
from jax.experimental.pallas import tpu as pltpu


def _round_up(x, m):
    return (x + m - 1) // m * m


def _wlf_tile_kernel(cid_ref, wid_ref, char_tab_ref, word_tab_ref, out_ref, *, char_size):
    """One grid step processes TILE tokens.

    cid_ref, wid_ref : (TILE, 1) int32 token ids (char / word)
    char_tab_ref     : (Vc_pad, C) — full char table, VMEM resident
    word_tab_ref     : (Vw_pad, W) — full word table, VMEM resident
    out_ref          : (TILE, C + W)
    """
    cids = cid_ref[...]                      # (TILE, 1)
    wids = wid_ref[...]                      # (TILE, 1)
    tile = cids.shape[0]
    vc = char_tab_ref.shape[0]
    vw = word_tab_ref.shape[0]

    # TPU gather idiom: one-hot (TILE, V) built on the VPU, row gather done as a
    # matmul on the MXU (contraction dim V padded to a multiple of 128 in the wrapper).
    onehot_c = (jax.lax.broadcasted_iota(jnp.int32, (tile, vc), 1) == cids
                ).astype(char_tab_ref.dtype)
    onehot_w = (jax.lax.broadcasted_iota(jnp.int32, (tile, vw), 1) == wids
                ).astype(word_tab_ref.dtype)

    g_char = jnp.dot(onehot_c, char_tab_ref[...], preferred_element_type=jnp.float32)
    g_word = jnp.dot(onehot_w, word_tab_ref[...], preferred_element_type=jnp.float32)

    # Concatenate along the feature (lane) axis inside the VMEM tile; the HBM
    # writeback is a single lane-dense (TILE, H) block per step.
    out_ref[:, :char_size] = g_char.astype(out_ref.dtype)
    out_ref[:, char_size:] = g_word.astype(out_ref.dtype)


def wlf_encode(seqs_char, seqs_word, att_mask, char_emb, word_emb, *, tile=256):
    """Pallas implementation of BaseWLFEncoder.forward.

    seqs_char, seqs_word: (B, L) int
    att_mask: (B, L) — unused (matches the PyTorch forward)
    char_emb: (num_char, C)
    word_emb: (num_word, W)
    returns: (B, L, C + W)
    """
    del att_mask  # forward() never uses it
    B, L = seqs_char.shape
    num_char, C = char_emb.shape
    num_word, W = word_emb.shape
    H = C + W
    n_tok = B * L
    out_dtype = char_emb.dtype

    # --- token tiling: TILE tokens per grid step, TILE a multiple of 8 sublanes ---
    tile = _round_up(max(8, min(tile, n_tok)), 8)
    n_pad = _round_up(n_tok, tile)
    n_tiles = n_pad // tile

    # ids as (n_pad, 1) int32; padded tokens point at row 0 and are sliced off after.
    cid = jnp.pad(seqs_char.reshape(-1).astype(jnp.int32), (0, n_pad - n_tok)).reshape(n_pad, 1)
    wid = jnp.pad(seqs_word.reshape(-1).astype(jnp.int32), (0, n_pad - n_tok)).reshape(n_pad, 1)

    # --- tables: pad vocab (the matmul contraction dim) to a multiple of 128 ---
    vc_pad = _round_up(num_char, 128)
    vw_pad = _round_up(num_word, 128)
    char_tab = jnp.pad(char_emb, ((0, vc_pad - num_char), (0, 0)))
    word_tab = jnp.pad(word_emb, ((0, vw_pad - num_word), (0, 0)))

    # VMEM budget: resident tables (pipeline double-buffers inputs) + io tiles + slack.
    itemsize = jnp.dtype(out_dtype).itemsize
    needed = (2 * (char_tab.size + word_tab.size) * itemsize
              + 2 * tile * H * itemsize + 4 * tile * 4 + (4 << 20))
    vmem_limit = int(max(needed, 32 * 1024 * 1024))
    # TODO(synk): if the real word table exceeds VMEM (e.g. 50k x 300 f32 on v7x's 64 MiB),
    # keep it in HBM (memory_space=pl.ANY) and gather its rows with a manually
    # double-buffered make_async_copy per token tile instead of the resident one-hot path.

    kernel = functools.partial(_wlf_tile_kernel, char_size=C)

    out = pl.pallas_call(
        kernel,
        out_shape=jax.ShapeDtypeStruct((n_pad, H), out_dtype),
        grid_spec=pltpu.PrefetchScalarGridSpec(
            num_scalar_prefetch=0,
            grid=(n_tiles,),
            in_specs=[
                pl.BlockSpec((tile, 1), lambda i: (i, 0)),     # char ids tile
                pl.BlockSpec((tile, 1), lambda i: (i, 0)),     # word ids tile
                pl.BlockSpec((vc_pad, C), lambda i: (0, 0)),   # char table, VMEM resident
                pl.BlockSpec((vw_pad, W), lambda i: (0, 0)),   # word table, VMEM resident
            ],
            out_specs=pl.BlockSpec((tile, H), lambda i: (i, 0)),
        ),
        compiler_params=pltpu.CompilerParams(
            dimension_semantics=("parallel",),   # tiles independent -> shard across TCs (v7x)
            vmem_limit_bytes=vmem_limit,
        ),
    )(cid, wid, char_tab, word_tab)

    return out[:n_tok].reshape(B, L, H)


if __name__ == "__main__":
    # Small, deterministic synthetic setup (no checkpoint loading).
    B, L = 2, 8
    num_char, num_word = 16, 12        # includes [UNK]/[PAD] slots conceptually
    char_size, word_size = 32, 32      # H = 64

    key = jax.random.PRNGKey(0)
    k1, k2, k3, k4 = jax.random.split(key, 4)

    # nn.Embedding default init is N(0, 1)
    char_emb = jax.random.normal(k1, (num_char, char_size), dtype=jnp.float32)
    word_emb = jax.random.normal(k2, (num_word, word_size), dtype=jnp.float32)

    seqs_char = jax.random.randint(k3, (B, L), 0, num_char, dtype=jnp.int32)
    seqs_word = jax.random.randint(k4, (B, L), 0, num_word, dtype=jnp.int32)
    att_mask = jnp.ones((B, L), dtype=jnp.uint8)

    out = wlf_encode(seqs_char, seqs_word, att_mask, char_emb, word_emb)
    out = jax.block_until_ready(out)

    # Reference (plain JAX) check of the embedding-gather + concat semantics.
    ref = jnp.concatenate(
        [jnp.take(char_emb, seqs_char, axis=0), jnp.take(word_emb, seqs_word, axis=0)],
        axis=-1,
    )
    assert out.shape == (B, L, char_size + word_size)
    assert jnp.allclose(out, ref), "Pallas output mismatch vs reference"

    print("KERNEL_OK")
</pallas_src>

<mosaic_0001>
module attributes {stable_mosaic.version = 11 : i64} {
  func.func @_wlf_tile_kernel(%arg0: i32, %arg1: memref<16x1xi32, #tpu.memory_space<vmem>>, %arg2: memref<16x1xi32, #tpu.memory_space<vmem>>, %arg3: memref<128x32xf32, #tpu.memory_space<vmem>>, %arg4: memref<128x32xf32, #tpu.memory_space<vmem>>, %arg5: memref<16x64xf32, #tpu.memory_space<vmem>>) attributes {dimension_semantics = [#tpu.dimension_semantics<parallel>], iteration_bounds = array<i64: 1>, scalar_prefetch = 0 : i64, scratch_operands = 0 : i64, tpu.core_type = #tpu.core_type<tc>, window_params = [{transform_indices = @transform_0, window_bounds = array<i64: 16, 1>}, {transform_indices = @transform_1, window_bounds = array<i64: 16, 1>}, {pipeline_mode = #tpu.pipeline_mode<synchronous>, transform_indices = @transform_2, window_bounds = array<i64: 128, 32>}, {pipeline_mode = #tpu.pipeline_mode<synchronous>, transform_indices = @transform_3, window_bounds = array<i64: 128, 32>}, {transform_indices = @transform_4, window_bounds = array<i64: 16, 64>}]} {
    %c0 = arith.constant 0 : index
    %c0_0 = arith.constant 0 : index
    %0 = vector.load %arg1[%c0, %c0_0] : memref<16x1xi32, #tpu.memory_space<vmem>>, vector<16x1xi32>
    %c0_1 = arith.constant 0 : index
    %c0_2 = arith.constant 0 : index
    %1 = vector.load %arg2[%c0_1, %c0_2] : memref<16x1xi32, #tpu.memory_space<vmem>>, vector<16x1xi32>
    %2 = tpu.iota {dimensions = array<i32: 1>} : vector<16x128xi32>
    %3 = vector.broadcast %0 : vector<16x1xi32> to vector<16x128xi32>
    %4 = arith.cmpi eq, %2, %3 : vector<16x128xi32>
    %5 = arith.extui %4 : vector<16x128xi1> to vector<16x128xi32>
    %6 = arith.sitofp %5 : vector<16x128xi32> to vector<16x128xf32>
    %7 = tpu.iota {dimensions = array<i32: 1>} : vector<16x128xi32>
    %8 = vector.broadcast %1 : vector<16x1xi32> to vector<16x128xi32>
    %9 = arith.cmpi eq, %7, %8 : vector<16x128xi32>
    %10 = arith.extui %9 : vector<16x128xi1> to vector<16x128xi32>
    %11 = arith.sitofp %10 : vector<16x128xi32> to vector<16x128xf32>
    %c0_3 = arith.constant 0 : index
    %c0_4 = arith.constant 0 : index
    %12 = vector.load %arg3[%c0_3, %c0_4] : memref<128x32xf32, #tpu.memory_space<vmem>>, vector<128x32xf32>
    %cst = arith.constant dense<0.000000e+00> : vector<16x32xf32>
    %13 = tpu.matmul %6, %12, %cst {dimension_numbers = #tpu.dot_dimension_numbers<[1], [0], [0], [1], [0, 0, 1, 1], [], []>} : vector<16x128xf32>, vector<128x32xf32>, vector<16x32xf32> -> vector<16x32xf32>
    %c0_5 = arith.constant 0 : index
    %c0_6 = arith.constant 0 : index
    %14 = vector.load %arg4[%c0_5, %c0_6] : memref<128x32xf32, #tpu.memory_space<vmem>>, vector<128x32xf32>
    %cst_7 = arith.constant dense<0.000000e+00> : vector<16x32xf32>
    %15 = tpu.matmul %11, %14, %cst_7 {dimension_numbers = #tpu.dot_dimension_numbers<[1], [0], [0], [1], [0, 0, 1, 1], [], []>} : vector<16x128xf32>, vector<128x32xf32>, vector<16x32xf32> -> vector<16x32xf32>
    %c0_8 = arith.constant 0 : index
    %c0_9 = arith.constant 0 : index
    %16 = vector.load %arg5[%c0_8, %c0_9] : memref<16x64xf32, #tpu.memory_space<vmem>>, vector<16x32xf32>
    tpu.vector_store %arg5[%c0_8, %c0_9], %13 {strides = array<i32>} : memref<16x64xf32, #tpu.memory_space<vmem>>, vector<16x32xf32>,
    %c0_10 = arith.constant 0 : index
    %c32 = arith.constant 32 : index
    %17 = vector.load %arg5[%c0_10, %c32] : memref<16x64xf32, #tpu.memory_space<vmem>>, vector<16x32xf32>
    tpu.vector_store %arg5[%c0_10, %c32], %15 {strides = array<i32>} : memref<16x64xf32, #tpu.memory_space<vmem>>, vector<16x32xf32>,
    return
  }
  func.func @transform_0(%arg0: i32) -> (i32, i32) {
    %c0_i32 = arith.constant 0 : i32
    %c0_i32_0 = arith.constant 0 : i32
    return %arg0, %c0_i32 : i32, i32
  }
  func.func @transform_1(%arg0: i32) -> (i32, i32) {
    %c0_i32 = arith.constant 0 : i32
    %c0_i32_0 = arith.constant 0 : i32
    return %arg0, %c0_i32 : i32, i32
  }
  func.func @transform_2(%arg0: i32) -> (i32, i32) {
    %c0_i32 = arith.constant 0 : i32
    %c0_i32_0 = arith.constant 0 : i32
    %c0_i32_1 = arith.constant 0 : i32
    return %c0_i32, %c0_i32_0 : i32, i32
  }
  func.func @transform_3(%arg0: i32) -> (i32, i32) {
    %c0_i32 = arith.constant 0 : i32
    %c0_i32_0 = arith.constant 0 : i32
    %c0_i32_1 = arith.constant 0 : i32
    return %c0_i32, %c0_i32_0 : i32, i32
  }
  func.func @transform_4(%arg0: i32) -> (i32, i32) {
    %c0_i32 = arith.constant 0 : i32
    %c0_i32_0 = arith.constant 0 : i32
    return %arg0, %c0_i32 : i32, i32
  }
}

</mosaic_0001>

<llo_original>
// kernel: tpu_custom_call.1
$region0: #{tpu_custom_call.1}
  #allocation0 [shape = 'u32[]', space=smem, size = 0x4, offset = 0x4, fixed_abs, tag = 'smem constant byte address 0x4 - core index']
  #allocation1 [shape = 'u32[72,128]{1,0:T(1,128)}', space=vmem, size = 0x9000, scoped, tag = 'internal scratch']
  %s0 = inlined_call_operand.vmem [shape: s32[16,1], index: 0, kind: input, shape index: {}]
  %s1 = inlined_call_operand.vmem [shape: s32[16,1], index: 1, kind: input, shape index: {}]
  %s2 = inlined_call_operand.vmem [shape: f32[128,32], index: 2, kind: input, shape index: {}]
  %s3 = inlined_call_operand.vmem [shape: f32[128,32], index: 3, kind: input, shape index: {}]
  %s4 = inlined_call_operand.hbm [shape: f32[16,64], index: 4, kind: output, shape index: {}]
  %s5 = sld [smem:[#allocation0]]
  $region26: #{tpu_custom_call.1} parent=0
    _
  %s7 = ssub.s32 1, %s5
  %s8 = scalar_select 0, %s7, %s5
  $region1: #{tpu_custom_call.1} parent=0
    #allocation2 [shape = 'u8[8192]{0}', space=vmem, size = 0x2000, scoped, tag = 'output window, operand 0, single buffered']
    #allocation3 [shape = 's32[1]{0}', space=sflag, size = 0x4, scoped, tag = 'scoped memory for tpu_custom_call.1']
    %9 = vsyncpa [#allocation3], 0
    // Predicated region
    $region2: #{tpu_custom_call.1} parent=1 // pred_check
      _
    $region3: #{tpu_custom_call.1} parent=1 // pred_check_branch
      %11 = sbr.rel (0) target = $region5
    $region4: #{tpu_custom_call.1} parent=1 // pred_region
      _
    $region5: #{tpu_custom_call.1} parent=1 // pred_fallthru
      _
    // Predicated region
    $region6: #{tpu_custom_call.1} parent=1 // pred_check
      _
    $region7: #{tpu_custom_call.1} parent=1 // pred_check_branch
      %13 = sbr.rel (0) target = $region9
    $region8: #{tpu_custom_call.1} parent=1 // pred_region
      _
    $region9: #{tpu_custom_call.1} parent=1 // pred_fallthru
      _
    // Predicated region
    $region10: #{tpu_custom_call.1} parent=1 // pred_check
      _
    $region11: #{tpu_custom_call.1} parent=1 // pred_check_branch
      %15 = sbr.rel (0) target = $region13
    $region12: #{tpu_custom_call.1} parent=1 // pred_region
      _
    $region13: #{tpu_custom_call.1} parent=1 // pred_fallthru
      _
    // Predicated region
    $region14: #{tpu_custom_call.1} parent=1 // pred_check
      _
    $region15: #{tpu_custom_call.1} parent=1 // pred_check_branch
      %17 = sbr.rel (0) target = $region17
    $region16: #{tpu_custom_call.1} parent=1 // pred_region
      _
    $region17: #{tpu_custom_call.1} parent=1 // pred_fallthru
      _
    %v18 = vld [vmem:[%s0] sm:$0xff]
    %v19 = vld [vmem:[%s0 + $0x8] sm:$0xff]
    %v20 = vld [vmem:[%s1] sm:$0xff]
    %v21 = vld [vmem:[%s1 + $0x8] sm:$0xff]
    %v22 = vlaneseq
    %v23 = vand.u32 %v22, 127
    %24 = vset.pattern.permute.xlu0 0
    %25 = vperm.xlu0 %24, %v18
    %v26 = vpop.permute.xlu0 %25
    %27 = vset.pattern.permute.xlu0 0
    %28 = vperm.xlu0 %27, %v19
    %v29 = vpop.permute.xlu0 %28
    %vm30 = vcmp.eq.s32.totalorder %v23, %v26
    %vm31 = vcmp.eq.s32.totalorder %v23, %v29
    %v32 = vsel %vm30, 1, 0
    %v33 = vsel %vm31, 1, 0
    %v34 = vcvt.s32.f32 %v32
    %v35 = vcvt.s32.f32 %v33
    %36 = vset.pattern.permute.xlu0 0
    %37 = vperm.xlu0 %36, %v20
    %v38 = vpop.permute.xlu0 %37
    %39 = vset.pattern.permute.xlu0 0
    %40 = vperm.xlu0 %39, %v21
    %v41 = vpop.permute.xlu0 %40
    %vm42 = vcmp.eq.s32.totalorder %v23, %v38
    %vm43 = vcmp.eq.s32.totalorder %v23, %v41
    %v44 = vsel %vm42, 1, 0
    %v45 = vsel %vm43, 1, 0
    %v46 = vcvt.s32.f32 %v44
    %v47 = vcvt.s32.f32 %v45
    %v48 = vld [vmem:[%s2] sm:$0xff]
    %v49 = vld [vmem:[%s2 + $0x8] sm:$0xff]
    %v50 = vld [vmem:[%s2 + $0x10] sm:$0xff]
    %v51 = vld [vmem:[%s2 + $0x18] sm:$0xff]
    %v52 = vld [vmem:[%s2 + $0x20] sm:$0xff]
    %v53 = vld [vmem:[%s2 + $0x28] sm:$0xff]
    %v54 = vld [vmem:[%s2 + $0x30] sm:$0xff]
    %v55 = vld [vmem:[%s2 + $0x38] sm:$0xff]
    %v56 = vld [vmem:[%s2 + $0x40] sm:$0xff]
    %v57 = vld [vmem:[%s2 + $0x48] sm:$0xff]
    %v58 = vld [vmem:[%s2 + $0x50] sm:$0xff]
    %v59 = vld [vmem:[%s2 + $0x58] sm:$0xff]
    %v60 = vld [vmem:[%s2 + $0x60] sm:$0xff]
    %v61 = vld [vmem:[%s2 + $0x68] sm:$0xff]
    %v62 = vld [vmem:[%s2 + $0x70] sm:$0xff]
    %v63 = vld [vmem:[%s2 + $0x78] sm:$0xff]
    %64 = vmatpush.msra.mxu0 %v63
    %65 = vmatpush.msra.mxu0 %v62
    %66 = vmatpush.msra.mxu0 %v61
    %67 = vmatpush.msra.mxu0 %v60
    %68 = vmatpush.msra.mxu0 %v59
    %69 = vmatpush.msra.mxu0 %v58
    %70 = vmatpush.msra.mxu0 %v57
    %71 = vmatpush.msra.mxu0 %v56
    %72 = vmatpush.msra.mxu0 %v55
    %73 = vmatpush.msra.mxu0 %v54
    %74 = vmatpush.msra.mxu0 %v53
    %75 = vmatpush.msra.mxu0 %v52
    %76 = vmatpush.msra.mxu0 %v51
    %77 = vmatpush.msra.mxu0 %v50
    %78 = vmatpush.msra.mxu0 %v49
    %79 = vmatpush.msra.mxu0 %v48
    %80 = vmatmul.f32.gmra.mxu0 %v34
    %v81 = vpop.f32.mrf.mxu0
    %v82 = vadd.f32 0.0, %v81
    %83 = vmatmul.f32.gmra.mxu0 %v35
    %v84 = vpop.f32.mrf.mxu0
    %v85 = vadd.f32 0.0, %v84
    %86 = vdwg.mxu0
    %v87 = vld [vmem:[%s3] sm:$0xff]
    %v88 = vld [vmem:[%s3 + $0x8] sm:$0xff]
    %v89 = vld [vmem:[%s3 + $0x10] sm:$0xff]
    %v90 = vld [vmem:[%s3 + $0x18] sm:$0xff]
    %v91 = vld [vmem:[%s3 + $0x20] sm:$0xff]
    %v92 = vld [vmem:[%s3 + $0x28] sm:$0xff]
    %v93 = vld [vmem:[%s3 + $0x30] sm:$0xff]
    %v94 = vld [vmem:[%s3 + $0x38] sm:$0xff]
    %v95 = vld [vmem:[%s3 + $0x40] sm:$0xff]
    %v96 = vld [vmem:[%s3 + $0x48] sm:$0xff]
    %v97 = vld [vmem:[%s3 + $0x50] sm:$0xff]
    %v98 = vld [vmem:[%s3 + $0x58] sm:$0xff]
    %v99 = vld [vmem:[%s3 + $0x60] sm:$0xff]
    %v100 = vld [vmem:[%s3 + $0x68] sm:$0xff]
    %v101 = vld [vmem:[%s3 + $0x70] sm:$0xff]
    %v102 = vld [vmem:[%s3 + $0x78] sm:$0xff]
    %103 = vmatpush.msra.mxu0 %v102
    %104 = vmatpush.msra.mxu0 %v101
    %105 = vmatpush.msra.mxu0 %v100
    %106 = vmatpush.msra.mxu0 %v99
    %107 = vmatpush.msra.mxu0 %v98
    %108 = vmatpush.msra.mxu0 %v97
    %109 = vmatpush.msra.mxu0 %v96
    %110 = vmatpush.msra.mxu0 %v95
    %111 = vmatpush.msra.mxu0 %v94
    %112 = vmatpush.msra.mxu0 %v93
    %113 = vmatpush.msra.mxu0 %v92
    %114 = vmatpush.msra.mxu0 %v91
    %115 = vmatpush.msra.mxu0 %v90
    %116 = vmatpush.msra.mxu0 %v89
    %117 = vmatpush.msra.mxu0 %v88
    %118 = vmatpush.msra.mxu0 %v87
    %119 = vmatmul.f32.gmra.mxu0 %v46
    %v120 = vpop.f32.mrf.mxu0
    %v121 = vadd.f32 0.0, %v120
    %122 = vmatmul.f32.gmra.mxu0 %v47
    %v123 = vpop.f32.mrf.mxu0
    %v124 = vadd.f32 0.0, %v123
    %125 = vdwg.mxu0
    %vm126 = vcmask 261120
    %127 = vst.msk [vmem:[#allocation2] sm:$0xff] %vm126, %v82
    %128 = vst.msk [vmem:[#allocation2 + $0x8] sm:$0xff] %vm126, %v85
    %131 = vrot.lane.b32.xlu0 %v121, 32
    %v132 = vpop.permute.xlu0 %131
    %133 = vrot.lane.b32.xlu0 %v124, 32
    %v134 = vpop.permute.xlu0 %133
    %vm137 = vcmask 523520
    %138 = vst.msk [vmem:[#allocation2] sm:$0xff] %vm137, %v132
    %139 = vst.msk [vmem:[#allocation2 + $0x8] sm:$0xff] %vm137, %v134
    // Predicated region
    $region18: #{tpu_custom_call.1} parent=1 // pred_check
      _
    $region19: #{tpu_custom_call.1} parent=1 // pred_check_branch
      %141 = sbr.rel (0) target = $region21
    $region20: #{tpu_custom_call.1} parent=1 // pred_region
      %143 = vsyncadd [#allocation3], 0
      %s144 = sshll.u32 [#allocation2], 4
      %s145 = int_to_ptr.vmem [resolvable:$true] %s144
      %s146 = sshll.u32 %s4, 4
      %s147 = int_to_ptr.hbm [resolvable:$true] %s146
      %152 = dma.vmem_to_hbm [thread:$0]  %s145, 256, %s147, [#allocation3], 128, 128, 8
    $region21: #{tpu_custom_call.1} parent=1 // pred_fallthru
      _
    // Predicated region
    $region22: #{tpu_custom_call.1} parent=1 // pred_check
      _
    $region23: #{tpu_custom_call.1} parent=1 // pred_check_branch
      %154 = sbr.rel (0) target = $region25
    $region24: #{tpu_custom_call.1} parent=1 // pred_region
      %156 = dma.done [#allocation3], 256
    $region25: #{tpu_custom_call.1} parent=1 // pred_fallthru
      _
    %157 = vsyncpa [#allocation3], 1

</llo_original>
